<compile_context>
chip_gen: v7x
topology: tpu7x:2x2x1
jax: 0.10.0
libtpu: 0.0.40
codegen_flags: <defaults>
</compile_context>

<pallas_src>
import numpy as np
import jax
import jax.numpy as jnp
from jax.experimental import pallas as pl
from jax.experimental.pallas import tpu as pltpu


def _round_up(x, m):
    return ((x + m - 1) // m) * m


# TODO(synk): the reference takes an arbitrary `similarity_function` callable; it is
# fixed here to the canonical weighted soft-IoU over the spatial dims:
#   iou = sum(w*p*g) / (sum(w*(p + g - p*g)) + 1e-6)
def _pq_mask_stats_kernel(pred_ref, gt_ref, w_ref, fg_ref, out_ref,
                          inter_acc, union_acc, nz_acc):
    """Grid = (B, N/TN, HW/THW); the HW (last) axis is the reduction axis."""
    k = pl.program_id(2)

    @pl.when(k == 0)
    def _init():
        inter_acc[...] = jnp.zeros_like(inter_acc)
        union_acc[...] = jnp.zeros_like(union_acc)
        nz_acc[...] = jnp.zeros_like(nz_acc)

    p = pred_ref[0]                         # (TN, THW) bf16
    g = gt_ref[0]                           # (TN, THW) bf16
    w = w_ref[0]                            # (1,  THW) bf16 (broadcast over masks)

    pg = p * g                              # VPU
    wpg = w * pg                            # weighted intersection integrand
    wun = w * (p + g - pg)                  # weighted union integrand
    nz = (g > 0).astype(p.dtype)            # strictly-positive indicator

    # Weighted spatial sums via the MXU: chunk @ all-ones rhs gives the per-mask sum
    # replicated across all 128 lanes, accumulated exactly in f32 VMEM scratch.
    ones_rhs = jnp.ones((p.shape[1], 128), dtype=p.dtype)
    inter_acc[...] += jnp.dot(wpg, ones_rhs, preferred_element_type=jnp.float32)
    union_acc[...] += jnp.dot(wun, ones_rhs, preferred_element_type=jnp.float32)
    nz_acc[...] += jnp.dot(nz, ones_rhs, preferred_element_type=jnp.float32)

    @pl.when(k == pl.num_programs(2) - 1)
    def _finalize():
        inter = inter_acc[:, 0:1]           # (TN, 1) — every lane holds the sum
        union = union_acc[:, 0:1]
        iou = inter / (union + 1e-6)
        # any(gt > 0) over space == (count of strictly-positive pixels) > 0
        gtnz = (nz_acc[:, 0:1] > 0.0).astype(jnp.float32)
        fg = fg_ref[0]                      # (TN, 1) f32

        # soft_threshold(iou, threshold=0.5, beta=4.0)
        one_m = 1.0 - iou
        p4 = (iou * iou) * (iou * iou)
        q4 = (one_m * one_m) * (one_m * one_m)
        true_p = p4 / (p4 + q4)
        false_p = 1.0 - true_p

        tp_ind = true_p * fg * gtnz
        soft_fn = false_p * gtnz
        soft_fp = (1.0 - gtnz) * false_p * fg

        num = tp_ind * iou                               # per-mask numerator term
        den = tp_ind + 0.5 * soft_fn + 0.5 * soft_fp     # per-mask denominator term
        out_ref[0, :, 0:1] = num.astype(out_ref.dtype)
        out_ref[0, :, 1:2] = den.astype(out_ref.dtype)


def pq_mask_stats(pred, gt, weights, fg, *, compute_dtype=jnp.bfloat16,
                  max_tn=128, max_thw=8192):
    """Per-mask numerator/denominator terms of the PQ loss, computed on TPU."""
    B, N, H, W = pred.shape
    HW = H * W

    # --- tile sizes (re-derived from shapes; safe on v5e / v6e / v7x VMEM) ---
    n_pad8 = _round_up(N, 8)
    TN = min(n_pad8, max_tn)
    N_pad = _round_up(n_pad8, TN)
    hw_pad128 = _round_up(HW, 128)
    THW = min(hw_pad128, max_thw)
    HW_pad = _round_up(HW, THW)

    in_sz = np.dtype(compute_dtype).itemsize
    vmem_est = (2 * 2 * TN * THW * in_sz      # pred + gt blocks, double-buffered
                + 2 * THW * in_sz             # weights block, double-buffered
                + THW * 128 * in_sz           # all-ones MXU rhs
                + 3 * TN * 128 * 4            # f32 accumulators
                + 2 * TN * 4 + 2 * TN * 2 * 4)  # fg block + fused output block
    vmem_limit = int(min(max(2 * vmem_est, 32 * 1024 * 1024), 48 * 1024 * 1024))

    # --- lane-dense flattened layout; zero padding is inert for every term ---
    p2 = jnp.pad(pred.reshape(B, N, HW).astype(compute_dtype),
                 ((0, 0), (0, N_pad - N), (0, HW_pad - HW)))
    g2 = jnp.pad(gt.reshape(B, N, HW).astype(compute_dtype),
                 ((0, 0), (0, N_pad - N), (0, HW_pad - HW)))
    w2 = jnp.pad(weights.reshape(B, 1, HW).astype(compute_dtype),
                 ((0, 0), (0, 0), (0, HW_pad - HW)))
    fg2 = jnp.pad(fg.astype(jnp.float32), ((0, 0), (0, N_pad - N)))[..., None]

    out = pl.pallas_call(
        _pq_mask_stats_kernel,
        out_shape=jax.ShapeDtypeStruct((B, N_pad, 2), jnp.float32),
        grid_spec=pltpu.PrefetchScalarGridSpec(
            num_scalar_prefetch=0,
            grid=(B, N_pad // TN, HW_pad // THW),
            in_specs=[
                pl.BlockSpec((1, TN, THW), lambda b, n, k: (b, n, k)),   # pred
                pl.BlockSpec((1, TN, THW), lambda b, n, k: (b, n, k)),   # gt
                pl.BlockSpec((1, 1, THW), lambda b, n, k: (b, 0, k)),    # weights
                pl.BlockSpec((1, TN, 1), lambda b, n, k: (b, n, 0)),     # fg prob
            ],
            out_specs=pl.BlockSpec((1, TN, 2), lambda b, n, k: (b, n, 0)),
            scratch_shapes=[pltpu.VMEM((TN, 128), jnp.float32)] * 3,
        ),
        compiler_params=pltpu.CompilerParams(
            dimension_semantics=("parallel", "parallel", "arbitrary"),
            vmem_limit_bytes=vmem_limit),
    )(p2, g2, w2, fg2)

    return out[:, :N, 0], out[:, :N, 1]


@jax.jit
def _pq_forward(pred, gt, weights, fg, sel, eps):
    """Pallas per-mask terms + on-device per-category reduction (one host fetch)."""
    num_term, den_term = pq_mask_stats(pred, gt, weights, fg)
    num_c = jnp.einsum('bn,cbn->c', num_term, sel)
    den_c = jnp.einsum('bn,cbn->c', den_term, sel)
    valid = den_c > 0.0
    pq_c = (num_c + eps) / (den_c + eps)
    n_valid = jnp.sum(valid.astype(jnp.float32))
    full_pq = jnp.sum(jnp.where(valid, pq_c, 0.0)) / n_valid
    loss = 1.0 - full_pq
    return pq_c, valid, n_valid, full_pq, loss


class PanopticQualityLoss:
    """JAX/Pallas port of the PyTorch PanopticQualityLoss module (no params)."""

    def __init__(self, thing_ids, eps=0.1):
        self.thing_ids = thing_ids
        self.eps = eps

    def __call__(self, pan_pred_batch, pan_gt_batch, category_indices_batch,
                 weights, foreground_prob, similarity_function=None):
        # TODO(synk): `similarity_function` is fixed to the weighted soft-IoU baked
        # into the Pallas kernel; an arbitrary callable cannot be lowered.
        B, N = pan_pred_batch.shape[0], pan_pred_batch.shape[1]

        all_cats = sorted({c for b in range(B)
                           for c in category_indices_batch[b].keys()})
        sel = np.zeros((len(all_cats), B, N), np.float32)
        for ci, cat in enumerate(all_cats):
            for b in range(B):
                idx = category_indices_batch[b].get(cat)
                if idx is not None and len(idx) > 0:
                    sel[ci, b, np.asarray(idx, dtype=np.int64)] = 1.0

        pq_c, valid, n_valid, full_pq, loss = _pq_forward(
            pan_pred_batch, pan_gt_batch, weights, foreground_prob,
            jnp.asarray(sel), jnp.float32(self.eps))

        # Single host fetch of a handful of scalars; the dict output is host-side
        # by construction in the reference module.
        pq_c, valid, n_valid, full_pq, loss = jax.device_get(
            (pq_c, valid, n_valid, full_pq, loss))

        log_frac_pq_per_cat = {}
        denom = float(full_pq) * float(n_valid) + 1e-6
        for ci, cat in enumerate(all_cats):
            if valid[ci]:
                log_frac_pq_per_cat[cat] = float(pq_c[ci]) / denom
        return float(loss), log_frac_pq_per_cat


if __name__ == "__main__":
    B, N, H, W = 2, 8, 16, 16
    key = jax.random.PRNGKey(0)
    k1, k2, k3, k4 = jax.random.split(key, 4)

    pan_pred = jax.random.uniform(k1, (B, N, H, W), dtype=jnp.float32)
    # binary-ish ground-truth masks; some mask channels are left entirely zero
    gt_raw = jax.random.uniform(k2, (B, N, H, W), dtype=jnp.float32)
    pan_gt = (gt_raw > 0.6).astype(jnp.float32)
    pan_gt = pan_gt.at[0, 4].set(0.0).at[1, 7].set(0.0)   # empty-gt channels
    weights = jax.random.uniform(k3, (B, H, W), dtype=jnp.float32)
    foreground_prob = jax.random.uniform(k4, (B, N), dtype=jnp.float32)

    category_indices_batch = [
        {1: [0, 1, 2], 2: [3, 4], 7: [5, 6, 7]},
        {1: [0, 1], 3: [2, 3, 4, 5], 7: [6, 7]},
    ]

    # Exercise the raw Pallas kernel once and block on the result.
    num, den = pq_mask_stats(pan_pred, pan_gt, weights, foreground_prob)
    jax.block_until_ready((num, den))
    assert np.all(np.isfinite(np.asarray(num)))
    assert np.all(np.isfinite(np.asarray(den)))

    loss_fn = PanopticQualityLoss(thing_ids={1, 2, 3, 7}, eps=0.1)
    loss, log_frac = loss_fn(pan_pred, pan_gt, category_indices_batch,
                             weights, foreground_prob)

    assert np.isfinite(loss)
    assert all(np.isfinite(v) for v in log_frac.values())
    print("KERNEL_OK")
</pallas_src>

<mosaic_0001>
module attributes {stable_mosaic.version = 11 : i64} {
  func.func @_pq_mask_stats_kernel(%arg0: i32, %arg1: i32, %arg2: i32, %arg3: memref<1x8x256xbf16, #tpu.memory_space<vmem>>, %arg4: memref<1x8x256xbf16, #tpu.memory_space<vmem>>, %arg5: memref<1x1x256xbf16, #tpu.memory_space<vmem>>, %arg6: memref<1x8x1xf32, #tpu.memory_space<vmem>>, %arg7: memref<1x8x2xf32, #tpu.memory_space<vmem>>, %arg8: memref<8x128xf32, #tpu.memory_space<vmem>>, %arg9: memref<8x128xf32, #tpu.memory_space<vmem>>, %arg10: memref<8x128xf32, #tpu.memory_space<vmem>>) attributes {dimension_semantics = [#tpu.dimension_semantics<parallel>, #tpu.dimension_semantics<parallel>, #tpu.dimension_semantics<arbitrary>], iteration_bounds = array<i64: 2, 1, 1>, scalar_prefetch = 0 : i64, scratch_operands = 3 : i64, tpu.core_type = #tpu.core_type<tc>, window_params = [{transform_indices = @transform_0, window_bounds = array<i64: 1, 8, 256>}, {transform_indices = @transform_1, window_bounds = array<i64: 1, 8, 256>}, {transform_indices = @transform_2, window_bounds = array<i64: 1, 1, 256>}, {transform_indices = @transform_3, window_bounds = array<i64: 1, 8, 1>}, {transform_indices = @transform_4, window_bounds = array<i64: 1, 8, 2>}]} {
    %c0_i32 = arith.constant 0 : i32
    %0 = arith.cmpi eq, %arg2, %c0_i32 : i32
    %1 = arith.extui %0 : i1 to i32
    %c0_i32_0 = arith.constant 0 : i32
    %2 = arith.cmpi ne, %1, %c0_i32_0 : i32
    scf.if %2 {
      %cst_27 = arith.constant 0.000000e+00 : f32
      %37 = vector.broadcast %cst_27 : f32 to vector<8x128xf32>
      %c0_28 = arith.constant 0 : index
      %c0_29 = arith.constant 0 : index
      %38 = vector.load %arg8[%c0_28, %c0_29] : memref<8x128xf32, #tpu.memory_space<vmem>>, vector<8x128xf32>
      tpu.vector_store %arg8[%c0_28, %c0_29], %37 {strides = array<i32>} : memref<8x128xf32, #tpu.memory_space<vmem>>, vector<8x128xf32>,
      %cst_30 = arith.constant 0.000000e+00 : f32
      %39 = vector.broadcast %cst_30 : f32 to vector<8x128xf32>
      %c0_31 = arith.constant 0 : index
      %c0_32 = arith.constant 0 : index
      %40 = vector.load %arg9[%c0_31, %c0_32] : memref<8x128xf32, #tpu.memory_space<vmem>>, vector<8x128xf32>
      tpu.vector_store %arg9[%c0_31, %c0_32], %39 {strides = array<i32>} : memref<8x128xf32, #tpu.memory_space<vmem>>, vector<8x128xf32>,
      %cst_33 = arith.constant 0.000000e+00 : f32
      %41 = vector.broadcast %cst_33 : f32 to vector<8x128xf32>
      %c0_34 = arith.constant 0 : index
      %c0_35 = arith.constant 0 : index
      %42 = vector.load %arg10[%c0_34, %c0_35] : memref<8x128xf32, #tpu.memory_space<vmem>>, vector<8x128xf32>
      tpu.vector_store %arg10[%c0_34, %c0_35], %41 {strides = array<i32>} : memref<8x128xf32, #tpu.memory_space<vmem>>, vector<8x128xf32>,
    } else {
    }
    %c0 = arith.constant 0 : index
    %c0_1 = arith.constant 0 : index
    %c0_2 = arith.constant 0 : index
    %3 = vector.load %arg3[%c0, %c0_1, %c0_2] : memref<1x8x256xbf16, #tpu.memory_space<vmem>>, vector<1x8x256xbf16>
    %4 = vector.shape_cast %3 : vector<1x8x256xbf16> to vector<8x256xbf16>
    %c0_3 = arith.constant 0 : index
    %c0_4 = arith.constant 0 : index
    %c0_5 = arith.constant 0 : index
    %5 = vector.load %arg4[%c0_3, %c0_4, %c0_5] : memref<1x8x256xbf16, #tpu.memory_space<vmem>>, vector<1x8x256xbf16>
    %6 = vector.shape_cast %5 : vector<1x8x256xbf16> to vector<8x256xbf16>
    %c0_6 = arith.constant 0 : index
    %c0_7 = arith.constant 0 : index
    %c0_8 = arith.constant 0 : index
    %7 = vector.load %arg5[%c0_6, %c0_7, %c0_8] : memref<1x1x256xbf16, #tpu.memory_space<vmem>>, vector<1x1x256xbf16>
    %8 = vector.shape_cast %7 : vector<1x1x256xbf16> to vector<1x256xbf16>
    %9 = arith.mulf %4, %6 : vector<8x256xbf16>
    %10 = vector.broadcast %8 : vector<1x256xbf16> to vector<8x256xbf16>
    %11 = arith.mulf %10, %9 : vector<8x256xbf16>
    %12 = arith.addf %4, %6 : vector<8x256xbf16>
    %13 = arith.subf %12, %9 : vector<8x256xbf16>
    %14 = vector.broadcast %8 : vector<1x256xbf16> to vector<8x256xbf16>
    %15 = arith.mulf %14, %13 : vector<8x256xbf16>
    %cst = arith.constant 0.000000e+00 : bf16
    %16 = vector.broadcast %cst : bf16 to vector<8x256xbf16>
    %17 = arith.cmpf ogt, %6, %16 : vector<8x256xbf16>
    %18 = arith.extui %17 : vector<8x256xi1> to vector<8x256xi32>
    %19 = arith.sitofp %18 : vector<8x256xi32> to vector<8x256xf32>
    %20 = arith.truncf %19 : vector<8x256xf32> to vector<8x256xbf16>
    %cst_9 = arith.constant 1.000000e+00 : bf16
    %21 = vector.broadcast %cst_9 : bf16 to vector<256x128xbf16>
    %c0_10 = arith.constant 0 : index
    %c0_11 = arith.constant 0 : index
    %22 = vector.load %arg8[%c0_10, %c0_11] : memref<8x128xf32, #tpu.memory_space<vmem>>, vector<8x128xf32>
    %cst_12 = arith.constant dense<0.000000e+00> : vector<8x128xf32>
    %23 = tpu.matmul %11, %21, %cst_12 {dimension_numbers = #tpu.dot_dimension_numbers<[1], [0], [0], [1], [0, 0, 1, 1], [], []>} : vector<8x256xbf16>, vector<256x128xbf16>, vector<8x128xf32> -> vector<8x128xf32>
    %24 = arith.addf %22, %23 : vector<8x128xf32>
    %c0_13 = arith.constant 0 : index
    %c0_14 = arith.constant 0 : index
    %25 = vector.load %arg8[%c0_13, %c0_14] : memref<8x128xf32, #tpu.memory_space<vmem>>, vector<8x128xf32>
    tpu.vector_store %arg8[%c0_13, %c0_14], %24 {strides = array<i32>} : memref<8x128xf32, #tpu.memory_space<vmem>>, vector<8x128xf32>,
    %c0_15 = arith.constant 0 : index
    %c0_16 = arith.constant 0 : index
    %26 = vector.load %arg9[%c0_15, %c0_16] : memref<8x128xf32, #tpu.memory_space<vmem>>, vector<8x128xf32>
    %cst_17 = arith.constant dense<0.000000e+00> : vector<8x128xf32>
    %27 = tpu.matmul %15, %21, %cst_17 {dimension_numbers = #tpu.dot_dimension_numbers<[1], [0], [0], [1], [0, 0, 1, 1], [], []>} : vector<8x256xbf16>, vector<256x128xbf16>, vector<8x128xf32> -> vector<8x128xf32>
    %28 = arith.addf %26, %27 : vector<8x128xf32>
    %c0_18 = arith.constant 0 : index
    %c0_19 = arith.constant 0 : index
    %29 = vector.load %arg9[%c0_18, %c0_19] : memref<8x128xf32, #tpu.memory_space<vmem>>, vector<8x128xf32>
    tpu.vector_store %arg9[%c0_18, %c0_19], %28 {strides = array<i32>} : memref<8x128xf32, #tpu.memory_space<vmem>>, vector<8x128xf32>,
    %c0_20 = arith.constant 0 : index
    %c0_21 = arith.constant 0 : index
    %30 = vector.load %arg10[%c0_20, %c0_21] : memref<8x128xf32, #tpu.memory_space<vmem>>, vector<8x128xf32>
    %cst_22 = arith.constant dense<0.000000e+00> : vector<8x128xf32>
    %31 = tpu.matmul %20, %21, %cst_22 {dimension_numbers = #tpu.dot_dimension_numbers<[1], [0], [0], [1], [0, 0, 1, 1], [], []>} : vector<8x256xbf16>, vector<256x128xbf16>, vector<8x128xf32> -> vector<8x128xf32>
    %32 = arith.addf %30, %31 : vector<8x128xf32>
    %c0_23 = arith.constant 0 : index
    %c0_24 = arith.constant 0 : index
    %33 = vector.load %arg10[%c0_23, %c0_24] : memref<8x128xf32, #tpu.memory_space<vmem>>, vector<8x128xf32>
    tpu.vector_store %arg10[%c0_23, %c0_24], %32 {strides = array<i32>} : memref<8x128xf32, #tpu.memory_space<vmem>>, vector<8x128xf32>,
    %c0_i32_25 = arith.constant 0 : i32
    %34 = arith.cmpi eq, %arg2, %c0_i32_25 : i32
    %35 = arith.extui %34 : i1 to i32
    %c0_i32_26 = arith.constant 0 : i32
    %36 = arith.cmpi ne, %35, %c0_i32_26 : i32
    scf.if %36 {
      %c0_27 = arith.constant 0 : index
      %c0_28 = arith.constant 0 : index
      %37 = vector.load %arg8[%c0_27, %c0_28] : memref<8x128xf32, #tpu.memory_space<vmem>>, vector<8x1xf32>
      %c0_29 = arith.constant 0 : index
      %c0_30 = arith.constant 0 : index
      %38 = vector.load %arg9[%c0_29, %c0_30] : memref<8x128xf32, #tpu.memory_space<vmem>>, vector<8x1xf32>
      %cst_31 = arith.constant 9.99999997E-7 : f32
      %39 = vector.broadcast %cst_31 : f32 to vector<8x1xf32>
      %40 = arith.addf %38, %39 : vector<8x1xf32>
      %41 = arith.divf %37, %40 : vector<8x1xf32>
      %c0_32 = arith.constant 0 : index
      %c0_33 = arith.constant 0 : index
      %42 = vector.load %arg10[%c0_32, %c0_33] : memref<8x128xf32, #tpu.memory_space<vmem>>, vector<8x1xf32>
      %cst_34 = arith.constant 0.000000e+00 : f32
      %43 = vector.broadcast %cst_34 : f32 to vector<8x1xf32>
      %44 = arith.cmpf ogt, %42, %43 : vector<8x1xf32>
      %45 = arith.extui %44 : vector<8x1xi1> to vector<8x1xi32>
      %46 = arith.sitofp %45 : vector<8x1xi32> to vector<8x1xf32>
      %c0_35 = arith.constant 0 : index
      %c0_36 = arith.constant 0 : index
      %c0_37 = arith.constant 0 : index
      %47 = vector.load %arg6[%c0_35, %c0_36, %c0_37] : memref<1x8x1xf32, #tpu.memory_space<vmem>>, vector<1x8x1xf32>
      %48 = vector.shape_cast %47 : vector<1x8x1xf32> to vector<8x1xf32>
      %cst_38 = arith.constant 1.000000e+00 : f32
      %49 = vector.broadcast %cst_38 : f32 to vector<8x1xf32>
      %50 = arith.subf %49, %41 : vector<8x1xf32>
      %51 = arith.mulf %41, %41 : vector<8x1xf32>
      %52 = arith.mulf %41, %41 : vector<8x1xf32>
      %53 = arith.mulf %51, %52 : vector<8x1xf32>
      %54 = arith.mulf %50, %50 : vector<8x1xf32>
      %55 = arith.mulf %50, %50 : vector<8x1xf32>
      %56 = arith.mulf %54, %55 : vector<8x1xf32>
      %57 = arith.addf %53, %56 : vector<8x1xf32>
      %58 = arith.divf %53, %57 : vector<8x1xf32>
      %cst_39 = arith.constant 1.000000e+00 : f32
      %59 = vector.broadcast %cst_39 : f32 to vector<8x1xf32>
      %60 = arith.subf %59, %58 : vector<8x1xf32>
      %61 = arith.mulf %58, %48 : vector<8x1xf32>
      %62 = arith.mulf %61, %46 : vector<8x1xf32>
      %63 = arith.mulf %60, %46 : vector<8x1xf32>
      %cst_40 = arith.constant 1.000000e+00 : f32
      %64 = vector.broadcast %cst_40 : f32 to vector<8x1xf32>
      %65 = arith.subf %64, %46 : vector<8x1xf32>
      %66 = arith.mulf %65, %60 : vector<8x1xf32>
      %67 = arith.mulf %66, %48 : vector<8x1xf32>
      %68 = arith.mulf %62, %41 : vector<8x1xf32>
      %cst_41 = arith.constant 5.000000e-01 : f32
      %69 = vector.broadcast %cst_41 : f32 to vector<8x1xf32>
      %70 = arith.mulf %69, %63 : vector<8x1xf32>
      %71 = arith.addf %62, %70 : vector<8x1xf32>
      %cst_42 = arith.constant 5.000000e-01 : f32
      %72 = vector.broadcast %cst_42 : f32 to vector<8x1xf32>
      %73 = arith.mulf %72, %67 : vector<8x1xf32>
      %74 = arith.addf %71, %73 : vector<8x1xf32>
      %c0_43 = arith.constant 0 : index
      %c0_44 = arith.constant 0 : index
      %c0_45 = arith.constant 0 : index
      %75 = vector.load %arg7[%c0_43, %c0_44, %c0_45] : memref<1x8x2xf32, #tpu.memory_space<vmem>>, vector<1x8x1xf32>
      %76 = vector.shape_cast %75 : vector<1x8x1xf32> to vector<8x1xf32>
      %77 = vector.shape_cast %68 : vector<8x1xf32> to vector<1x8x1xf32>
      tpu.vector_store %arg7[%c0_43, %c0_44, %c0_45], %77 {strides = array<i32>} : memref<1x8x2xf32, #tpu.memory_space<vmem>>, vector<1x8x1xf32>,
      %c0_46 = arith.constant 0 : index
      %c0_47 = arith.constant 0 : index
      %c1 = arith.constant 1 : index
      %78 = vector.load %arg7[%c0_46, %c0_47, %c1] : memref<1x8x2xf32, #tpu.memory_space<vmem>>, vector<1x8x1xf32>
      %79 = vector.shape_cast %78 : vector<1x8x1xf32> to vector<8x1xf32>
      %80 = vector.shape_cast %74 : vector<8x1xf32> to vector<1x8x1xf32>
      tpu.vector_store %arg7[%c0_46, %c0_47, %c1], %80 {strides = array<i32>} : memref<1x8x2xf32, #tpu.memory_space<vmem>>, vector<1x8x1xf32>,
    } else {
    }
    return
  }
  func.func @transform_0(%arg0: i32, %arg1: i32, %arg2: i32) -> (i32, i32, i32) {
    %c0_i32 = arith.constant 0 : i32
    return %arg0, %arg1, %arg2 : i32, i32, i32
  }
  func.func @transform_1(%arg0: i32, %arg1: i32, %arg2: i32) -> (i32, i32, i32) {
    %c0_i32 = arith.constant 0 : i32
    return %arg0, %arg1, %arg2 : i32, i32, i32
  }
  func.func @transform_2(%arg0: i32, %arg1: i32, %arg2: i32) -> (i32, i32, i32) {
    %c0_i32 = arith.constant 0 : i32
    %c0_i32_0 = arith.constant 0 : i32
    return %arg0, %c0_i32, %arg2 : i32, i32, i32
  }
  func.func @transform_3(%arg0: i32, %arg1: i32, %arg2: i32) -> (i32, i32, i32) {
    %c0_i32 = arith.constant 0 : i32
    %c0_i32_0 = arith.constant 0 : i32
    return %arg0, %arg1, %c0_i32 : i32, i32, i32
  }
  func.func @transform_4(%arg0: i32, %arg1: i32, %arg2: i32) -> (i32, i32, i32) {
    %c0_i32 = arith.constant 0 : i32
    %c0_i32_0 = arith.constant 0 : i32
    return %arg0, %arg1, %c0_i32 : i32, i32, i32
  }
}

</mosaic_0001>

<llo_original>
// kernel: tpu_custom_call.1
$region0: #{tpu_custom_call.1}
  #allocation0 [shape = 'u32[]', space=smem, size = 0x4, offset = 0x4, fixed_abs, tag = 'smem constant byte address 0x4 - core index']
  #allocation1 [shape = 'u32[144,128]{1,0:T(1,128)}', space=vmem, size = 0x12000, scoped, tag = 'internal scratch']
  #allocation2 [shape = 'f32[8,128]{1,0:T(8,128)}', space=vmem, size = 0x1000, scoped, tag = 'scratch operand']
  #allocation3 [shape = 'f32[8,128]{1,0:T(8,128)}', space=vmem, size = 0x1000, scoped, tag = 'scratch operand']
  #allocation4 [shape = 'f32[8,128]{1,0:T(8,128)}', space=vmem, size = 0x1000, scoped, tag = 'scratch operand']
  %s0 = inlined_call_operand.vmem [shape: bf16[2,8,256], index: 0, kind: input, shape index: {}]
  %s1 = inlined_call_operand.hbm [shape: bf16[2,8,256], index: 1, kind: input, shape index: {}]
  %s2 = inlined_call_operand.vmem [shape: bf16[2,1,256], index: 2, kind: input, shape index: {}]
  %s3 = inlined_call_operand.vmem [shape: f32[2,8,1], index: 3, kind: input, shape index: {}]
  %s4 = inlined_call_operand.vmem [shape: f32[2,8,2], index: 4, kind: output, shape index: {}]
  %s5 = sld [smem:[#allocation0]]
  $region61: #{tpu_custom_call.1} parent=0
    _
  %s7 = ssub.s32 1, %s5
  %s8 = scalar_select 0, %s7, %s5
  $region1: #{tpu_custom_call.1} parent=0
    #allocation5 [shape = 'u8[8192]{0}', space=vmem, size = 0x2000, scoped, tag = 'input window, operand 1']
    #allocation6 [shape = 's32[2]{0}', space=sflag, size = 0x8, scoped, tag = 'scoped memory for tpu_custom_call.1']
    %9 = vsyncpa [#allocation6], 0
    %s10 = scalar_lea.sflag [#allocation6], 1
    %11 = vsyncpa %s10, 0
    loop: start=0, step=1, limit=4
    $region2: #{tpu_custom_call.1} parent=1 // loop_pre_header
      _
    $region3: #{tpu_custom_call.1} parent=1 // loop_header
      %s13 = sphi 0, %s17
      %p14 = scmp.ge.s32.totalorder %s13, 4
      %s20 = sphi 0, %s39
      %s21 = sphi 0, %s35
      %s22 = sphi 0, %s31
      %s23 = sphi 0, %s20
      %s24 = sphi 0, %s21
      %s25 = sphi 0, %s22
      %s26 = sphi 0, %s23
      %s27 = sphi 0, %s24
      %s28 = sphi 0, %s25
      %s46 = sphi 0, %s48
      %s49 = sphi 0, %s46
      %s50 = sphi 0, %s49
      %s66 = sphi 0, %s50
      %s76 = sphi 0, %s78
      %s79 = sphi 0, %s76
      %s80 = sphi 0, %s79
      %s96 = sphi 0, %s80
      %s104 = sphi 0, %s106
      %s107 = sphi 0, %s104
      %s108 = sphi 0, %s107
      %s124 = sphi 0, %s108
      %s132 = sphi 0, %s134
      %s135 = sphi 0, %s132
      %s136 = sphi 0, %s135
      %s152 = sphi 0, %s136
      %s160 = sphi 0, %s162
      %s163 = sphi 0, %s160
      %s164 = sphi 0, %s163
      %s180 = sphi 0, %s164
    $region4: #{tpu_custom_call.1} parent=1 // loop_header_branch
      %16 = sbr.rel (%p14) target = $region8
    $region5: #{tpu_custom_call.1} parent=1 // loop_body
      %s18 = ssub.s32 %s13, 1
      %s19 = ssub.s32 %s13, 2
      %s29 = sadd.s32 1, %s22
      %p30 = scmp.ge.s32.totalorder %s29, 1
      %s31 = scalar_select %p30, 0, %s29
      %s32 = sadd.s32 1, %s21
      %s33 = scalar_select %p30, %s32, %s21
      %p34 = scmp.ge.s32.totalorder %s33, 1
      %s35 = scalar_select %p34, 0, %s33
      %s36 = sadd.s32 1, %s20
      %s37 = scalar_select %p34, %s36, %s20
      %p38 = scmp.ge.s32.totalorder %s37, 2
      %s39 = scalar_select %p38, 0, %s37
      %s40 = ssub.s32 %s20, %s39
      %s41 = ssub.s32 %s21, %s35
      %s42 = sor.u32 %s40, %s41
      %s43 = ssub.s32 %s22, %s31
      %s44 = sor.u32 %s42, %s43
      %p45 = scmp.eq.s32.totalorder %s44, 0
      %s47 = sadd.s32 %s46, 1
      %s48 = scalar_select %p45, %s46, %s47
      %p51 = pneg %p45
      %p52 = scmp.eq.s32.totalorder %s13, 1
      %p53 = por %p51, %p52
      %p54 = scmp.ne.s32.totalorder %s46, %s49
      %p55 = scmp.eq.s32.totalorder %s13, 0
      %p56 = por %p54, %p55
      %p57 = scmp.ne.s32.totalorder %s46, %s49
      %p58 = scmp.eq.s32.totalorder %s18, 1
      %p59 = por %p57, %p58
      %p60 = scmp.ne.s32.totalorder %s49, %s50
      %p61 = scmp.eq.s32.totalorder %s18, 0
      %p62 = por %p60, %p61
      %p63 = scmp.ne.s32.totalorder %s49, %s50
      %p64 = scmp.eq.s32.totalorder %s19, 1
      %p65 = por %p63, %p64
      %p67 = scmp.ne.s32.totalorder %s50, %s66
      %p68 = scmp.eq.s32.totalorder %s19, 0
      %p69 = por %p67, %p68
      %s70 = ssub.s32 %s20, %s39
      %s71 = ssub.s32 %s21, %s35
      %s72 = sor.u32 %s70, %s71
      %s73 = ssub.s32 %s22, %s31
      %s74 = sor.u32 %s72, %s73
      %p75 = scmp.eq.s32.totalorder %s74, 0
      %s77 = sadd.s32 %s76, 1
      %s78 = scalar_select %p75, %s76, %s77
      %p81 = pneg %p75
      %p82 = scmp.eq.s32.totalorder %s13, 1
      %p83 = por %p81, %p82
      %p84 = scmp.ne.s32.totalorder %s76, %s79
      %p85 = scmp.eq.s32.totalorder %s13, 0
      %p86 = por %p84, %p85
      %p87 = scmp.ne.s32.totalorder %s76, %s79
      %p88 = scmp.eq.s32.totalorder %s18, 1
      %p89 = por %p87, %p88
      %p90 = scmp.ne.s32.totalorder %s79, %s80
      %p91 = scmp.eq.s32.totalorder %s18, 0
      %p92 = por %p90, %p91
      %p93 = scmp.ne.s32.totalorder %s79, %s80
      %p94 = scmp.eq.s32.totalorder %s19, 1
      %p95 = por %p93, %p94
      %p97 = scmp.ne.s32.totalorder %s80, %s96
      %p98 = scmp.eq.s32.totalorder %s19, 0
      %p99 = por %p97, %p98
      %s100 = ssub.s32 %s20, %s39
      %s101 = ssub.s32 %s22, %s31
      %s102 = sor.u32 %s100, %s101
      %p103 = scmp.eq.s32.totalorder %s102, 0
      %s105 = sadd.s32 %s104, 1
      %s106 = scalar_select %p103, %s104, %s105
      %p109 = pneg %p103
      %p110 = scmp.eq.s32.totalorder %s13, 1
      %p111 = por %p109, %p110
      %p112 = scmp.ne.s32.totalorder %s104, %s107
      %p113 = scmp.eq.s32.totalorder %s13, 0
      %p114 = por %p112, %p113
      %p115 = scmp.ne.s32.totalorder %s104, %s107
      %p116 = scmp.eq.s32.totalorder %s18, 1
      %p117 = por %p115, %p116
      %p118 = scmp.ne.s32.totalorder %s107, %s108
      %p119 = scmp.eq.s32.totalorder %s18, 0
      %p120 = por %p118, %p119
      %p121 = scmp.ne.s32.totalorder %s107, %s108
      %p122 = scmp.eq.s32.totalorder %s19, 1
      %p123 = por %p121, %p122
      %p125 = scmp.ne.s32.totalorder %s108, %s124
      %p126 = scmp.eq.s32.totalorder %s19, 0
      %p127 = por %p125, %p126
      %s128 = ssub.s32 %s20, %s39
      %s129 = ssub.s32 %s21, %s35
      %s130 = sor.u32 %s128, %s129
      %p131 = scmp.eq.s32.totalorder %s130, 0
      %s133 = sadd.s32 %s132, 1
      %s134 = scalar_select %p131, %s132, %s133
      %p137 = pneg %p131
      %p138 = scmp.eq.s32.totalorder %s13, 1
      %p139 = por %p137, %p138
      %p140 = scmp.ne.s32.totalorder %s132, %s135
      %p141 = scmp.eq.s32.totalorder %s13, 0
      %p142 = por %p140, %p141
      %p143 = scmp.ne.s32.totalorder %s132, %s135
      %p144 = scmp.eq.s32.totalorder %s18, 1
      %p145 = por %p143, %p144
      %p146 = scmp.ne.s32.totalorder %s135, %s136
      %p147 = scmp.eq.s32.totalorder %s18, 0
      %p148 = por %p146, %p147
      %p149 = scmp.ne.s32.totalorder %s135, %s136
      %p150 = scmp.eq.s32.totalorder %s19, 1
      %p151 = por %p149, %p150
      %p153 = scmp.ne.s32.totalorder %s136, %s152
      %p154 = scmp.eq.s32.totalorder %s19, 0
      %p155 = por %p153, %p154
      %s156 = ssub.s32 %s20, %s39
      %s157 = ssub.s32 %s21, %s35
      %s158 = sor.u32 %s156, %s157
      %p159 = scmp.eq.s32.totalorder %s158, 0
      %s161 = sadd.s32 %s160, 1
      %s162 = scalar_select %p159, %s160, %s161
      %p165 = pneg %p159
      %p166 = scmp.eq.s32.totalorder %s13, 1
      %p167 = por %p165, %p166
      %p168 = scmp.ne.s32.totalorder %s160, %s163
      %p169 = scmp.eq.s32.totalorder %s13, 0
      %p170 = por %p168, %p169
      %p171 = scmp.ne.s32.totalorder %s160, %s163
      %p172 = scmp.eq.s32.totalorder %s18, 1
      %p173 = por %p171, %p172
      %p174 = scmp.ne.s32.totalorder %s163, %s164
      %p175 = scmp.eq.s32.totalorder %s18, 0
      %p176 = por %p174, %p175
      %p177 = scmp.ne.s32.totalorder %s163, %s164
      %p178 = scmp.eq.s32.totalorder %s19, 1
      %p179 = por %p177, %p178
      %p181 = scmp.ne.s32.totalorder %s164, %s180
      %p182 = scmp.eq.s32.totalorder %s19, 0
      %p183 = por %p181, %p182
      %p184 = scmp.le.s32.totalorder 1, %s13
      %p185 = scmp.lt.s32.totalorder %s13, 3
      %p186 = pnand %p184, %p185
      %p187 = pneg %p186
      // Predicated region
      $region9: #{tpu_custom_call.1} parent=5 // pred_check
        _
      $region10: #{tpu_custom_call.1} parent=5 // pred_check_branch
        %189 = sbr.rel (%p186) target = $region12
      $region11: #{tpu_custom_call.1} parent=5 // pred_region
        %s190 = ssub.s32 %s13, 1
      $region12: #{tpu_custom_call.1} parent=5 // pred_fallthru
        _
      %p191 = scmp.lt.s32.totalorder %s13, 2
      // Predicated region
      $region13: #{tpu_custom_call.1} parent=5 // pred_check
        %p192 = pneg %p191
      $region14: #{tpu_custom_call.1} parent=5 // pred_check_branch
        %194 = sbr.rel (%p192) target = $region16
      $region15: #{tpu_custom_call.1} parent=5 // pred_region
        // Predicated region
        $region17: #{tpu_custom_call.1} parent=15 // pred_check
          %p195 = pneg %p56
        $region18: #{tpu_custom_call.1} parent=15 // pred_check_branch
          %197 = sbr.rel (%p195) target = $region20
        $region19: #{tpu_custom_call.1} parent=15 // pred_region
          %s198 = smul.u32 2, %s22
          %p199 = scmp.lt.s32.totalorder %s20, 1
          %s200 = scalar_select %p199, %s20, 1
          %p201 = scmp.lt.s32.totalorder %s21, 0
          %s202 = scalar_select %p201, %s21, 0
          %p203 = scmp.lt.s32.totalorder %s198, 1
          %s204 = scalar_select %p203, %s198, 1
          %s205 = smul.addr %s202, 2
          %s206 = sadd.s32 %s204, %s205
          %s207 = smul.addr %s200, 2
          %s208 = sadd.s32 %s206, %s207
          %s209 = smul.addr %s208, 4
          %s210 = scalar_lea.vmem %s0, %s209
          %s211 = smul.u32 2, %s22
        $region20: #{tpu_custom_call.1} parent=15 // pred_fallthru
          _
        // Predicated region
        $region21: #{tpu_custom_call.1} parent=15 // pred_check
          %p212 = pneg %p86
        $region22: #{tpu_custom_call.1} parent=15 // pred_check_branch
          %214 = sbr.rel (%p212) target = $region24
        $region23: #{tpu_custom_call.1} parent=15 // pred_region
          %s215 = sand.u32 %s76, 1
          %s216 = scalar_lea.sflag [#allocation6], %s215
          %s217 = sand.u32 %s76, 1
          %s218 = smul.addr %s217, 8
          %s219 = scalar_lea.vmem [#allocation5], %s218
          %s220 = smul.u32 2, %s22
          %s222 = ssub.s32 128, 128
          %223 = vsyncadd %s216, %s222
          %s224 = smul.addr %s21, 2
          %s225 = sadd.s32 %s220, %s224
          %s226 = smul.addr %s20, 2
          %s227 = sadd.s32 %s225, %s226
          %s228 = smul.addr %s227, 64
          %s229 = scalar_lea.hbm %s1, %s228
          %s231 = sshll.u32 %s219, 4
          %s232 = int_to_ptr.vmem [resolvable:$true] %s231
          %234 = dma.hbm_to_vmem [thread:$0]  %s229, 128, %s232, %s216
        $region24: #{tpu_custom_call.1} parent=15 // pred_fallthru
          _
        // Predicated region
        $region25: #{tpu_custom_call.1} parent=15 // pred_check
          %p235 = pneg %p114
        $region26: #{tpu_custom_call.1} parent=15 // pred_check_branch
          %237 = sbr.rel (%p235) target = $region28
        $region27: #{tpu_custom_call.1} parent=15 // pred_region
          %s238 = smul.u32 2, %s22
          %p239 = scmp.lt.s32.totalorder %s20, 1
          %s240 = scalar_select %p239, %s20, 1
          %p241 = scmp.lt.s32.totalorder %s238, 1
          %s242 = scalar_select %p241, %s238, 1
          %s243 = smul.addr %s240, 2
          %s244 = sadd.s32 %s242, %s243
          %s245 = scalar_lea.vmem %s2, %s244
          %s246 = smul.u32 2, %s22
        $region28: #{tpu_custom_call.1} parent=15 // pred_fallthru
          _
        // Predicated region
        $region29: #{tpu_custom_call.1} parent=15 // pred_check
          %p247 = pneg %p142
        $region30: #{tpu_custom_call.1} parent=15 // pred_check_branch
          %249 = sbr.rel (%p247) target = $region32
        $region31: #{tpu_custom_call.1} parent=15 // pred_region
          %p250 = scmp.lt.s32.totalorder %s20, 1
          %s251 = scalar_select %p250, %s20, 1
          %p252 = scmp.lt.s32.totalorder %s21, 0
          %s253 = scalar_select %p252, %s21, 0
          %s254 = sadd.s32 %s253, %s251
          %s255 = smul.addr %s254, 8
          %s256 = scalar_lea.vmem %s3, %s255
        $region32: #{tpu_custom_call.1} parent=15 // pred_fallthru
          _
      $region16: #{tpu_custom_call.1} parent=5 // pred_fallthru
        _
      %p257 = scmp.le.s32.totalorder 1, %s13
      %p258 = scmp.lt.s32.totalorder %s13, 3
      %p259 = pnand %p257, %p258
      %p260 = pneg %p259
      // Predicated region
      $region33: #{tpu_custom_call.1} parent=5 // pred_check
        _
      $region34: #{tpu_custom_call.1} parent=5 // pred_check_branch
        %262 = sbr.rel (%p259) target = $region36
      $region35: #{tpu_custom_call.1} parent=5 // pred_region
        %s263 = ssub.s32 %s13, 1
        %s264 = sand.u32 %s79, 1
        %s265 = scalar_lea.sflag [#allocation6], %s264
        %s266 = sand.u32 %s79, 1
        %s267 = smul.addr %s266, 8
        %s268 = scalar_lea.vmem [#allocation5], %s267
        // Predicated region
        $region37: #{tpu_custom_call.1} parent=35 // pred_check
          %p269 = pneg %p92
        $region38: #{tpu_custom_call.1} parent=35 // pred_check_branch
          %271 = sbr.rel (%p269) target = $region40
        $region39: #{tpu_custom_call.1} parent=35 // pred_region
          %272 = dma.done %s265, 128
        $region40: #{tpu_custom_call.1} parent=35 // pred_fallthru
          _
        %s273 = smul.u32 2, %s25
        %p274 = scmp.lt.s32.totalorder %s23, 1
        %s275 = scalar_select %p274, %s23, 1
        %p276 = scmp.lt.s32.totalorder %s24, 0
        %s277 = scalar_select %p276, %s24, 0
        %p278 = scmp.lt.s32.totalorder %s273, 1
        %s279 = scalar_select %p278, %s273, 1
        %s280 = smul.addr %s277, 2
        %s281 = sadd.s32 %s279, %s280
        %s282 = smul.addr %s275, 2
        %s283 = sadd.s32 %s281, %s282
        %s284 = smul.addr %s283, 4
        %s285 = scalar_lea.vmem %s0, %s284
        %p286 = pneg %p62
        %p287 = pneg %p59
        %s288 = sand.u32 %s79, 1
        %s289 = scalar_lea.sflag [#allocation6], %s288
        %s290 = sand.u32 %s79, 1
        %s291 = smul.addr %s290, 8
        %s292 = scalar_lea.vmem [#allocation5], %s291
        %p293 = pneg %p92
        %p294 = pneg %p89
        %s295 = smul.u32 2, %s25
        %p296 = scmp.lt.s32.totalorder %s23, 1
        %s297 = scalar_select %p296, %s23, 1
        %p298 = scmp.lt.s32.totalorder %s295, 1
        %s299 = scalar_select %p298, %s295, 1
        %s300 = smul.addr %s297, 2
        %s301 = sadd.s32 %s299, %s300
        %s302 = scalar_lea.vmem %s2, %s301
        %p303 = pneg %p120
        %p304 = pneg %p117
        %p305 = scmp.lt.s32.totalorder %s23, 1
        %s306 = scalar_select %p305, %s23, 1
        %p307 = scmp.lt.s32.totalorder %s24, 0
        %s308 = scalar_select %p307, %s24, 0
        %s309 = sadd.s32 %s308, %s306
        %s310 = smul.addr %s309, 8
        %s311 = scalar_lea.vmem %s3, %s310
        %p312 = pneg %p148
        %p313 = pneg %p145
        %p314 = pneg %p176
        %p315 = pneg %p173
        %p316 = scmp.lt.s32.totalorder %s23, 1
        %s317 = scalar_select %p316, %s23, 1
        %p318 = scmp.lt.s32.totalorder %s24, 0
        %s319 = scalar_select %p318, %s24, 0
        %s320 = sadd.s32 %s319, %s317
        %s321 = smul.addr %s320, 8
        %s322 = scalar_lea.vmem %s4, %s321
        %s323 = smul.u32 2, %s25
        %p324 = scmp.lt.s32.totalorder %s23, 1
        %s325 = scalar_select %p324, %s23, 1
        %p326 = scmp.lt.s32.totalorder %s24, 0
        %s327 = scalar_select %p326, %s24, 0
        %p328 = scmp.lt.s32.totalorder %s323, 1
        %s329 = scalar_select %p328, %s323, 1
        %s330 = smul.addr %s327, 2
        %s331 = sadd.s32 %s329, %s330
        %s332 = smul.addr %s325, 2
        %s333 = sadd.s32 %s331, %s332
        %s334 = smul.addr %s333, 4
        %s335 = scalar_lea.vmem %s0, %s334
        %s336 = smul.u32 2, %s25
        %s337 = smul.u32 2, %s25
        %s338 = smul.u32 2, %s25
        %p339 = scmp.lt.s32.totalorder %s23, 1
        %s340 = scalar_select %p339, %s23, 1
        %p341 = scmp.lt.s32.totalorder %s338, 1
        %s342 = scalar_select %p341, %s338, 1
        %s343 = smul.addr %s340, 2
        %s344 = sadd.s32 %s342, %s343
        %s345 = scalar_lea.vmem %s2, %s344
        %s346 = smul.u32 2, %s25
        %p347 = scmp.lt.s32.totalorder %s23, 1
        %s348 = scalar_select %p347, %s23, 1
        %p349 = scmp.lt.s32.totalorder %s24, 0
        %s350 = scalar_select %p349, %s24, 0
        %s351 = sadd.s32 %s350, %s348
        %s352 = smul.addr %s351, 8
        %s353 = scalar_lea.vmem %s3, %s352
        %p354 = scmp.lt.s32.totalorder %s23, 1
        %s355 = scalar_select %p354, %s23, 1
        %p356 = scmp.lt.s32.totalorder %s24, 0
        %s357 = scalar_select %p356, %s24, 0
        %s358 = sadd.s32 %s357, %s355
        %s359 = smul.addr %s358, 8
        %s360 = scalar_lea.vmem %s4, %s359
        %p365 = scmp.eq.s32.totalorder %s25, 0
        // Predicated region
        $region41: #{tpu_custom_call.1} parent=35 // pred_check
          %p366 = pneg %p365
        $region42: #{tpu_custom_call.1} parent=35 // pred_check_branch
          %368 = sbr.rel (%p366) target = $region44
        $region43: #{tpu_custom_call.1} parent=35 // pred_region
          %369 = vst [vmem:[#allocation2] sm:$0xff] 0.0
          %370 = vst [vmem:[#allocation3] sm:$0xff] 0.0
          %371 = vst [vmem:[#allocation4] sm:$0xff] 0.0
        $region44: #{tpu_custom_call.1} parent=35 // pred_fallthru
          _
        %v372 = vld [vmem:[%s335] sm:$0xff]
        %v373 = vld [vmem:[%s268] sm:$0xff]
        %v374 = vld [vmem:[%s345] sm:$0x3]
        %v375 = vmul.bf16 %v372, %v373
        %v378 = vunpack.c.l.s4 1966171168
        %v379 = vunpack.c.0.s8 %v378
        %v380 = vlaneseq
        %v381 = vshrl.u32 %v380, 7
        %v382 = vsub.s32 %v379, %v381
        %v383 = vrot.slane %v374, %v382
        %v384 = vcombine.high %v383, %v383
        %v386 = vunpack.c.l.s4 1966171168
        %v387 = vunpack.c.0.s8 %v386
        %v388 = vlaneseq
        %v389 = vshrl.u32 %v388, 7
        %v390 = vsub.s32 %v387, %v389
        %v391 = vrot.slane %v383, %v390
        %v393 = vunpack.c.l.s4 1966171168
        %v394 = vunpack.c.0.s8 %v393
        %v395 = vlaneseq
        %v396 = vshrl.u32 %v395, 7
        %v397 = vsub.s32 %v394, %v396
        %v398 = vrot.slane %v384, %v397
        %v400 = vpack.i.b16 %v391, %v391
        %v402 = vlaneseq
        %v403 = vshrl.u32 %v402, 7
        %v404 = vsub.s32 0, %v403
        %v405 = vrot.slane %v400, %v404
        %v407 = vpack.i.b16 %v398, %v398
        %v409 = vlaneseq
        %v410 = vshrl.u32 %v409, 7
        %v411 = vsub.s32 0, %v410
        %v412 = vrot.slane %v407, %v411
        %v414 = vunpack.c.l.b16 %v375
        %v415 = vunpack.c.h.b16 %v375
        %v416 = vpack.c.b16 %v414, %v414
        %v417 = vpack.c.b16 %v415, %v415
        %v420 = vmul.bf16 %v405, %v416
        %v421 = vmul.bf16 %v412, %v417
        %v422 = vadd.bf16 %v372, %v373
        %v423 = vsub.bf16 %v422, %v375
        %v425 = vunpack.c.l.b16 %v423
        %v426 = vunpack.c.h.b16 %v423
        %v427 = vpack.c.b16 %v425, %v425
        %v428 = vpack.c.b16 %v426, %v426
        %v431 = vmul.bf16 %v405, %v427
        %v432 = vmul.bf16 %v412, %v428
        %vm433 = vcmp.gt.bf16.partialorder %v373, 0
        %v434 = vsel %vm433, 65537, 0
        %v435 = vunpack.c.l.b16 %v434
        %v436 = vunpack.c.h.b16 %v434
        %vm437 = vcmp.ne.s32.totalorder %v435, 0
        %vm438 = vcmp.ne.s32.totalorder %v436, 0
        %v439 = vsel %vm437, 1, 0
        %v440 = vsel %vm438, 1, 0
        %v441 = vcvt.s32.f32 %v439
        %v442 = vcvt.s32.f32 %v440
        %v443 = vpack.c.bf16 %v441, %v441
        %v444 = vpack.c.bf16 %v442, %v442
        %v445 = vld [vmem:[#allocation2] sm:$0xff]
        %446 = vmatprep.subr.bf16.mxu0 0
        %447 = vmatpush1.bf16.msra.mxu0 1065369472
        %448 = vmatprep.subr.bf16.mxu0 0
        %449 = vmatpush1.bf16.msra.mxu0 1065369472
        %450 = vmatprep.subr.bf16.mxu0 0
        %451 = vmatpush1.bf16.msra.mxu0 1065369472
        %452 = vmatprep.subr.bf16.mxu0 0
        %453 = vmatpush1.bf16.msra.mxu0 1065369472
        %454 = vmatprep.subr.bf16.mxu0 0
        %455 = vmatpush1.bf16.msra.mxu0 1065369472
        %456 = vmatprep.subr.bf16.mxu0 0
        %457 = vmatpush1.bf16.msra.mxu0 1065369472
        %458 = vmatprep.subr.bf16.mxu0 0
        %459 = vmatpush1.bf16.msra.mxu0 1065369472
        %460 = vmatprep.subr.bf16.mxu0 0
        %461 = vmatpush1.bf16.msra.mxu0 1065369472
        %462 = vmatprep.subr.bf16.mxu0 0
        %463 = vmatpush1.bf16.msra.mxu0 1065369472
        %464 = vmatprep.subr.bf16.mxu0 0
        %465 = vmatpush1.bf16.msra.mxu0 1065369472
        %466 = vmatprep.subr.bf16.mxu0 0
        %467 = vmatpush1.bf16.msra.mxu0 1065369472
        %468 = vmatprep.subr.bf16.mxu0 0
        %469 = vmatpush1.bf16.msra.mxu0 1065369472
        %470 = vmatprep.subr.bf16.mxu0 0
        %471 = vmatpush1.bf16.msra.mxu0 1065369472
        %472 = vmatprep.subr.bf16.mxu0 0
        %473 = vmatpush1.bf16.msra.mxu0 1065369472
        %474 = vmatprep.subr.bf16.mxu0 0
        %475 = vmatpush1.bf16.msra.mxu0 1065369472
        %476 = vmatprep.subr.bf16.mxu0 0
        %477 = vmatpush1.bf16.msra.mxu0 1065369472
        %478 = vmatprep.mubr.bf16.mxu0 %v421
        %479 = vmatmul.mubr.bf16.gmra.mrb[0].mxu0 %v420
        %v480 = vpop.f32.mrb[0].mxu0
        %v481 = vadd.f32 0.0, %v480
        %v482 = vpop.f32.mrb[0].mxu0
        %v483 = vpop.f32.mrb[0].mxu0
        %v484 = vpop.f32.mrb[0].mxu0
        %485 = vdwg.mxu0
        %v486 = vadd.f32 %v445, %v481
        %487 = vst [vmem:[#allocation2] sm:$0xff] %v486
        %v488 = vld [vmem:[#allocation3] sm:$0xff]
        %489 = vmatprep.subr.bf16.mxu0 0
        %490 = vmatpush1.bf16.msra.mxu0 1065369472
        %491 = vmatprep.subr.bf16.mxu0 0
        %492 = vmatpush1.bf16.msra.mxu0 1065369472
        %493 = vmatprep.subr.bf16.mxu0 0
        %494 = vmatpush1.bf16.msra.mxu0 1065369472
        %495 = vmatprep.subr.bf16.mxu0 0
        %496 = vmatpush1.bf16.msra.mxu0 1065369472
        %497 = vmatprep.subr.bf16.mxu0 0
        %498 = vmatpush1.bf16.msra.mxu0 1065369472
        %499 = vmatprep.subr.bf16.mxu0 0
        %500 = vmatpush1.bf16.msra.mxu0 1065369472
        %501 = vmatprep.subr.bf16.mxu0 0
        %502 = vmatpush1.bf16.msra.mxu0 1065369472
        %503 = vmatprep.subr.bf16.mxu0 0
        %504 = vmatpush1.bf16.msra.mxu0 1065369472
        %505 = vmatprep.subr.bf16.mxu0 0
        %506 = vmatpush1.bf16.msra.mxu0 1065369472
        %507 = vmatprep.subr.bf16.mxu0 0
        %508 = vmatpush1.bf16.msra.mxu0 1065369472
        %509 = vmatprep.subr.bf16.mxu0 0
        %510 = vmatpush1.bf16.msra.mxu0 1065369472
        %511 = vmatprep.subr.bf16.mxu0 0
        %512 = vmatpush1.bf16.msra.mxu0 1065369472
        %513 = vmatprep.subr.bf16.mxu0 0
        %514 = vmatpush1.bf16.msra.mxu0 1065369472
        %515 = vmatprep.subr.bf16.mxu0 0
        %516 = vmatpush1.bf16.msra.mxu0 1065369472
        %517 = vmatprep.subr.bf16.mxu0 0
        %518 = vmatpush1.bf16.msra.mxu0 1065369472
        %519 = vmatprep.subr.bf16.mxu0 0
        %520 = vmatpush1.bf16.msra.mxu0 1065369472
        %521 = vmatprep.mubr.bf16.mxu0 %v432
        %522 = vmatmul.mubr.bf16.gmra.mrb[0].mxu0 %v431
        %v523 = vpop.f32.mrb[0].mxu0
        %v524 = vadd.f32 0.0, %v523
        %v525 = vpop.f32.mrb[0].mxu0
        %v526 = vpop.f32.mrb[0].mxu0
        %v527 = vpop.f32.mrb[0].mxu0
        %528 = vdwg.mxu0
        %v529 = vadd.f32 %v488, %v524
        %530 = vst [vmem:[#allocation3] sm:$0xff] %v529
        %v531 = vld [vmem:[#allocation4] sm:$0xff]
        %532 = vmatprep.subr.bf16.mxu0 0
        %533 = vmatpush1.bf16.msra.mxu0 1065369472
        %534 = vmatprep.subr.bf16.mxu0 0
        %535 = vmatpush1.bf16.msra.mxu0 1065369472
        %536 = vmatprep.subr.bf16.mxu0 0
        %537 = vmatpush1.bf16.msra.mxu0 1065369472
        %538 = vmatprep.subr.bf16.mxu0 0
        %539 = vmatpush1.bf16.msra.mxu0 1065369472
        %540 = vmatprep.subr.bf16.mxu0 0
        %541 = vmatpush1.bf16.msra.mxu0 1065369472
        %542 = vmatprep.subr.bf16.mxu0 0
        %543 = vmatpush1.bf16.msra.mxu0 1065369472
        %544 = vmatprep.subr.bf16.mxu0 0
        %545 = vmatpush1.bf16.msra.mxu0 1065369472
        %546 = vmatprep.subr.bf16.mxu0 0
        %547 = vmatpush1.bf16.msra.mxu0 1065369472
        %548 = vmatprep.subr.bf16.mxu0 0
        %549 = vmatpush1.bf16.msra.mxu0 1065369472
        %550 = vmatprep.subr.bf16.mxu0 0
        %551 = vmatpush1.bf16.msra.mxu0 1065369472
        %552 = vmatprep.subr.bf16.mxu0 0
        %553 = vmatpush1.bf16.msra.mxu0 1065369472
        %554 = vmatprep.subr.bf16.mxu0 0
        %555 = vmatpush1.bf16.msra.mxu0 1065369472
        %556 = vmatprep.subr.bf16.mxu0 0
        %557 = vmatpush1.bf16.msra.mxu0 1065369472
        %558 = vmatprep.subr.bf16.mxu0 0
        %559 = vmatpush1.bf16.msra.mxu0 1065369472
        %560 = vmatprep.subr.bf16.mxu0 0
        %561 = vmatpush1.bf16.msra.mxu0 1065369472
        %562 = vmatprep.subr.bf16.mxu0 0
        %563 = vmatpush1.bf16.msra.mxu0 1065369472
        %564 = vmatprep.mubr.bf16.mxu0 %v444
        %565 = vmatmul.mubr.bf16.gmra.mrb[0].mxu0 %v443
        %v566 = vpop.f32.mrb[0].mxu0
        %v567 = vadd.f32 0.0, %v566
        %v568 = vpop.f32.mrb[0].mxu0
        %v569 = vpop.f32.mrb[0].mxu0
        %v570 = vpop.f32.mrb[0].mxu0
        %571 = vdwg.mxu0
        %v572 = vadd.f32 %v531, %v567
        %573 = vst [vmem:[#allocation4] sm:$0xff] %v572
        // Predicated region
        $region45: #{tpu_custom_call.1} parent=35 // pred_check
          %p574 = pneg %p365
        $region46: #{tpu_custom_call.1} parent=35 // pred_check_branch
          %576 = sbr.rel (%p574) target = $region48
        $region47: #{tpu_custom_call.1} parent=35 // pred_region
          %v577 = vld [vmem:[#allocation2] sm:$0xff]
          %v578 = vld [vmem:[#allocation3] sm:$0xff]
          %v579 = vadd.f32 %v578, 1e-06
          %v580 = vrcp.pop %v579
          %v581 = vmul.f32 %v577, %v580
          %v582 = vld [vmem:[#allocation4] sm:$0xff]
          %vm583 = vcmp.gt.f32.partialorder %v582, 0.0
          %v584 = vsel %vm583, 1, 0
          %v585 = vcvt.s32.f32 %v584
          %v586 = vld [vmem:[%s353] sm:$0xff]
          %v587 = vsub.f32 1.0, %v581
          %v588 = vmul.f32 %v581, %v581
          %v589 = vmul.f32 %v588, %v588
          %v590 = vmul.f32 %v587, %v587
          %v591 = vmul.f32 %v590, %v590
          %v592 = vadd.f32 %v589, %v591
          %v593 = vrcp.pop %v592
          %v594 = vmul.f32 %v589, %v593
          %v595 = vsub.f32 1.0, %v594
          %v596 = vmul.f32 %v594, %v586
          %v597 = vmul.f32 %v596, %v585
          %v598 = vmul.f32 %v595, %v585
          %v599 = vsub.f32 1.0, %v585
          %v600 = vmul.f32 %v599, %v595
          %v601 = vmul.f32 %v600, %v586
          %v602 = vmul.f32 %v597, %v581
          %v603 = vmul.f32 %v598, 0.5
          %v604 = vadd.f32 %v597, %v603
          %v605 = vmul.f32 %v601, 0.5
          %v606 = vadd.f32 %v604, %v605
          %vm607 = vcmask 7168
          %608 = vst.msk [vmem:[%s360] sm:$0xff] %vm607, %v602
          %610 = vrot.lane.b32.xlu0 %v606, 1
          %v611 = vpop.permute.xlu0 %610
          %vm613 = vcmask 15368
          %614 = vst.msk [vmem:[%s360] sm:$0xff] %vm613, %v611
        $region48: #{tpu_custom_call.1} parent=35 // pred_fallthru
          _
        %p615 = scmp.lt.s32.totalorder %s23, 1
        %s616 = scalar_select %p615, %s23, 1
        %p617 = scmp.lt.s32.totalorder %s24, 0
        %s618 = scalar_select %p617, %s24, 0
        %s619 = sadd.s32 %s618, %s616
        %s620 = smul.addr %s619, 8
        %s621 = scalar_lea.vmem %s4, %s620
        // Predicated region
        $region49: #{tpu_custom_call.1} parent=35 // pred_check
          %p622 = pneg %p173
        $region50: #{tpu_custom_call.1} parent=35 // pred_check_branch
          %624 = sbr.rel (%p622) target = $region52
        $region51: #{tpu_custom_call.1} parent=35 // pred_region
          _
        $region52: #{tpu_custom_call.1} parent=35 // pred_fallthru
          _
      $region36: #{tpu_custom_call.1} parent=5 // pred_fallthru
        _
      %p625 = scmp.le.s32.totalorder 2, %s13
      // Predicated region
      $region53: #{tpu_custom_call.1} parent=5 // pred_check
        %p626 = pneg %p625
      $region54: #{tpu_custom_call.1} parent=5 // pred_check_branch
        %628 = sbr.rel (%p626) target = $region56
      $region55: #{tpu_custom_call.1} parent=5 // pred_region
        %s629 = ssub.s32 %s13, 2
        // Predicated region
        $region57: #{tpu_custom_call.1} parent=55 // pred_check
          %p630 = pneg %p179
        $region58: #{tpu_custom_call.1} parent=55 // pred_check_branch
          %632 = sbr.rel (%p630) target = $region60
        $region59: #{tpu_custom_call.1} parent=55 // pred_region
          %p633 = scmp.lt.s32.totalorder %s26, 1
          %s634 = scalar_select %p633, %s26, 1
          %p635 = scmp.lt.s32.totalorder %s27, 0
          %s636 = scalar_select %p635, %s27, 0
          %s637 = sadd.s32 %s636, %s634
          %s638 = smul.addr %s637, 8
          %s639 = scalar_lea.vmem %s4, %s638
        $region60: #{tpu_custom_call.1} parent=55 // pred_fallthru
          _
      $region56: #{tpu_custom_call.1} parent=5 // pred_fallthru
        _
    $region6: #{tpu_custom_call.1} parent=1 // loop_footer
      %s17 = sadd.s32 1, %s13
    $region7: #{tpu_custom_call.1} parent=1 // loop_footer_branch
      %12 = sbr.rel target = $region3
    $region8: #{tpu_custom_call.1} parent=1 // loop_exit
      _
    %640 = vsyncpa [#allocation6], 1
    %s641 = scalar_lea.sflag [#allocation6], 1
    %642 = vsyncpa %s641, 1

</llo_original>
